<compile_context>
chip_gen: v6e
topology: v6e:2x2x1
jax: 0.10.0
libtpu: 0.0.40
codegen_flags: <defaults>
</compile_context>

<pallas_src>
import jax
import jax.numpy as jnp
from jax.experimental import pallas as pl
from jax.experimental.pallas import tpu as pltpu


def _folio_end_kernel(ctx_ref, prefix_ref, suffix_ref, out_ref):
    # ctx_ref:    (n_ctx,   D)          shared context for this prompt group p
    # prefix_ref: (ct, 1,       D)      per-class SOS embedding
    # suffix_ref: (ct, suf_len, D)      per-class "classname." + EOS embeddings
    # out_ref:    (ct, seq_len, D)
    ct, _, d = out_ref.shape
    n_ctx = ctx_ref.shape[0]
    ctx_tile = jnp.broadcast_to(
        ctx_ref[...].astype(out_ref.dtype)[None, :, :], (ct, n_ctx, d))
    # Assemble in-vreg, then one contiguous full-block store (no masked
    # vst.msk partial stores along the seq axis).
    out_ref[...] = jnp.concatenate(
        [prefix_ref[...].astype(out_ref.dtype),
         ctx_tile,
         suffix_ref[...].astype(out_ref.dtype)],
        axis=1)


def folio_prompts(ctx, token_prefix, token_suffix, *, cls_tile=None,
                  out_dtype=None):
    """Fused FolioPromptLearner.forward ('end' position, generic context).

    ctx:          (n_prm, n_ctx, ctx_dim)       learnable context
    token_prefix: (n_prm * n_cls, 1, ctx_dim)   embedding[:, :1, :]
    token_suffix: (n_prm * n_cls, S, ctx_dim)   embedding[:, 1+n_ctx:, :]
    returns       (n_prm * n_cls, 1 + n_ctx + S, ctx_dim)
    """
    n_prm, n_ctx, d = ctx.shape
    total = token_prefix.shape[0]
    assert total % n_prm == 0, "token_prefix rows must be n_prm * n_cls"
    n_cls = total // n_prm
    suf_len = token_suffix.shape[1]
    seq_len = 1 + n_ctx + suf_len
    out_dtype = out_dtype or token_prefix.dtype
    out_itemsize = jnp.dtype(out_dtype).itemsize

    # --- class-tile size: keep one output block around ~2 MiB so the
    # double-buffered pipeline is comfortable even on v7x's 64 MiB VMEM. ---
    if cls_tile is None:
        budget = 2 * 1024 * 1024
        per_cls = seq_len * d * out_itemsize
        cls_tile = max(1, min(n_cls, budget // max(per_cls, 1)))
    cls_tile = int(max(1, min(cls_tile, n_cls)))
    while n_cls % cls_tile != 0:            # keep the grid exact (no ragged tile)
        cls_tile -= 1

    # Leading-dim-only reshapes (free) so the class axis can be tiled by BlockSpec.
    prefix4 = token_prefix.reshape(n_prm, n_cls, 1, d)
    suffix4 = token_suffix.reshape(n_prm, n_cls, suf_len, d)

    read_bytes = (ctx.size * jnp.dtype(ctx.dtype).itemsize
                  + token_prefix.size * jnp.dtype(token_prefix.dtype).itemsize
                  + token_suffix.size * jnp.dtype(token_suffix.dtype).itemsize)
    write_bytes = n_prm * n_cls * seq_len * d * out_itemsize

    out4 = pl.pallas_call(
        _folio_end_kernel,
        out_shape=jax.ShapeDtypeStruct((n_prm, n_cls, seq_len, d), out_dtype),
        grid=(n_prm, n_cls // cls_tile),
        in_specs=[
            # shared context: one (n_ctx, D) block per prompt group p
            pl.BlockSpec((None, n_ctx, d), lambda p, c: (p, 0, 0)),
            # per-class prefix / suffix tiles
            pl.BlockSpec((None, cls_tile, 1, d), lambda p, c: (p, c, 0, 0)),
            pl.BlockSpec((None, cls_tile, suf_len, d), lambda p, c: (p, c, 0, 0)),
        ],
        out_specs=pl.BlockSpec((None, cls_tile, seq_len, d),
                               lambda p, c: (p, c, 0, 0)),
        compiler_params=pltpu.CompilerParams(
            dimension_semantics=("parallel", "parallel"),
            vmem_limit_bytes=32 * 1024 * 1024),
        cost_estimate=pl.CostEstimate(
            flops=0, transcendentals=0,
            bytes_accessed=read_bytes + write_bytes),
    )(ctx, prefix4, suffix4)

    return out4.reshape(n_prm * n_cls, seq_len, d)


def reference_forward(ctx, token_prefix, token_suffix):
    # Pure-JAX replica of FolioPromptLearner.forward (generic ctx, 'end').
    n_prm, n_ctx, d = ctx.shape
    n_cls = token_prefix.shape[0] // n_prm
    ctx_e = jnp.broadcast_to(ctx[:, None, :, :], (n_prm, n_cls, n_ctx, d))
    ctx_e = ctx_e.reshape(n_prm * n_cls, n_ctx, d).astype(token_prefix.dtype)
    return jnp.concatenate([token_prefix, ctx_e, token_suffix], axis=1)


if __name__ == "__main__":
    # Small but representative shapes:
    #   n_prm=2 prompt groups, n_cls=8 classes, n_ctx=4 context tokens,
    #   ctx_dim=128 (lane-full), tokenized seq_len=16 -> suffix length 11.
    # CLIP dtype stand-in: bfloat16 (halves HBM writeback vs f32).
    n_prm, n_cls, n_ctx = 2, 8, 4
    ctx_dim = 128
    seq_len = 16
    suf_len = seq_len - 1 - n_ctx
    dtype = jnp.bfloat16

    key = jax.random.PRNGKey(0)
    k = jax.random.split(key, 3)

    # Learnable generic context (init: normal std=0.02, as in the module).
    ctx = (0.02 * jax.random.normal(k[0], (n_prm, n_ctx, ctx_dim),
                                    jnp.float32)).astype(dtype)
    # Synthetic token-embedding buffers (stand-ins for CLIP token_embedding):
    # token_prefix = embedding[:, :1, :], token_suffix = embedding[:, 1+n_ctx:, :]
    token_prefix = jax.random.normal(
        k[1], (n_prm * n_cls, 1, ctx_dim), jnp.float32).astype(dtype)
    token_suffix = jax.random.normal(
        k[2], (n_prm * n_cls, suf_len, ctx_dim), jnp.float32).astype(dtype)

    out = folio_prompts(ctx, token_prefix, token_suffix, cls_tile=4)
    out = jax.block_until_ready(out)

    ref = reference_forward(ctx, token_prefix, token_suffix)
    assert out.shape == (n_prm * n_cls, seq_len, ctx_dim), out.shape
    assert out.dtype == dtype, out.dtype
    # Pure data movement (no arithmetic): result must match exactly.
    assert jnp.array_equal(out.astype(jnp.float32), ref.astype(jnp.float32)), \
        "mismatch vs reference"

    print("KERNEL_OK")
</pallas_src>

<mosaic_0001>
module attributes {stable_mosaic.version = 11 : i64} {
  func.func @_folio_end_kernel(%arg0: i32, %arg1: i32, %arg2: memref<1x4x128xbf16, #tpu.memory_space<vmem>>, %arg3: memref<1x4x1x128xbf16, #tpu.memory_space<vmem>>, %arg4: memref<1x4x11x128xbf16, #tpu.memory_space<vmem>>, %arg5: memref<1x4x16x128xbf16, #tpu.memory_space<vmem>>) attributes {dimension_semantics = [#tpu.dimension_semantics<parallel>, #tpu.dimension_semantics<parallel>], iteration_bounds = array<i64: 2, 2>, scalar_prefetch = 0 : i64, scratch_operands = 0 : i64, tpu.core_type = #tpu.core_type<tc>, window_params = [{transform_indices = @transform_0, window_bounds = array<i64: 1, 4, 128>}, {transform_indices = @transform_1, window_bounds = array<i64: 1, 4, 1, 128>}, {transform_indices = @transform_2, window_bounds = array<i64: 1, 4, 11, 128>}, {transform_indices = @transform_3, window_bounds = array<i64: 1, 4, 16, 128>}]} {
    %c0 = arith.constant 0 : index
    %c0_0 = arith.constant 0 : index
    %c0_1 = arith.constant 0 : index
    %0 = vector.load %arg2[%c0, %c0_0, %c0_1] : memref<1x4x128xbf16, #tpu.memory_space<vmem>>, vector<1x4x128xbf16>
    %1 = vector.shape_cast %0 : vector<1x4x128xbf16> to vector<4x128xbf16>
    %2 = vector.shape_cast %1 : vector<4x128xbf16> to vector<1x4x128xbf16>
    %3 = vector.shape_cast %2 : vector<1x4x128xbf16> to vector<1x4x128xbf16>
    %4 = vector.broadcast %3 : vector<1x4x128xbf16> to vector<4x4x128xbf16>
    %c0_2 = arith.constant 0 : index
    %c0_3 = arith.constant 0 : index
    %c0_4 = arith.constant 0 : index
    %c0_5 = arith.constant 0 : index
    %5 = vector.load %arg3[%c0_2, %c0_3, %c0_4, %c0_5] : memref<1x4x1x128xbf16, #tpu.memory_space<vmem>>, vector<1x4x1x128xbf16>
    %6 = vector.shape_cast %5 : vector<1x4x1x128xbf16> to vector<4x1x128xbf16>
    %c0_6 = arith.constant 0 : index
    %c0_7 = arith.constant 0 : index
    %c0_8 = arith.constant 0 : index
    %c0_9 = arith.constant 0 : index
    %7 = vector.load %arg4[%c0_6, %c0_7, %c0_8, %c0_9] : memref<1x4x11x128xbf16, #tpu.memory_space<vmem>>, vector<1x4x11x128xbf16>
    %8 = vector.shape_cast %7 : vector<1x4x11x128xbf16> to vector<4x11x128xbf16>
    %9 = tpu.concatenate %6, %4, %8 in 1 : vector<4x1x128xbf16>, vector<4x4x128xbf16>, vector<4x11x128xbf16> -> vector<4x16x128xbf16>
    %c0_10 = arith.constant 0 : index
    %c0_11 = arith.constant 0 : index
    %c0_12 = arith.constant 0 : index
    %c0_13 = arith.constant 0 : index
    %10 = vector.load %arg5[%c0_10, %c0_11, %c0_12, %c0_13] : memref<1x4x16x128xbf16, #tpu.memory_space<vmem>>, vector<1x4x16x128xbf16>
    %11 = vector.shape_cast %10 : vector<1x4x16x128xbf16> to vector<4x16x128xbf16>
    %12 = vector.shape_cast %9 : vector<4x16x128xbf16> to vector<1x4x16x128xbf16>
    tpu.vector_store %arg5[%c0_10, %c0_11, %c0_12, %c0_13], %12 {strides = array<i32>} : memref<1x4x16x128xbf16, #tpu.memory_space<vmem>>, vector<1x4x16x128xbf16>,
    return
  }
  func.func @transform_0(%arg0: i32, %arg1: i32) -> (i32, i32, i32) {
    %c0_i32 = arith.constant 0 : i32
    %c0_i32_0 = arith.constant 0 : i32
    %c0_i32_1 = arith.constant 0 : i32
    return %arg0, %c0_i32, %c0_i32_0 : i32, i32, i32
  }
  func.func @transform_1(%arg0: i32, %arg1: i32) -> (i32, i32, i32, i32) {
    %c0_i32 = arith.constant 0 : i32
    %c0_i32_0 = arith.constant 0 : i32
    %c0_i32_1 = arith.constant 0 : i32
    return %arg0, %arg1, %c0_i32, %c0_i32_0 : i32, i32, i32, i32
  }
  func.func @transform_2(%arg0: i32, %arg1: i32) -> (i32, i32, i32, i32) {
    %c0_i32 = arith.constant 0 : i32
    %c0_i32_0 = arith.constant 0 : i32
    %c0_i32_1 = arith.constant 0 : i32
    return %arg0, %arg1, %c0_i32, %c0_i32_0 : i32, i32, i32, i32
  }
  func.func @transform_3(%arg0: i32, %arg1: i32) -> (i32, i32, i32, i32) {
    %c0_i32 = arith.constant 0 : i32
    %c0_i32_0 = arith.constant 0 : i32
    %c0_i32_1 = arith.constant 0 : i32
    return %arg0, %arg1, %c0_i32, %c0_i32_0 : i32, i32, i32, i32
  }
}

</mosaic_0001>

<llo_original>
// kernel: tpu_custom_call.1
$region0: #{tpu_custom_call.1}
  #allocation0 [shape = 'u32[]', space=smem, size = 0x4, offset = 0x4, fixed_abs, tag = 'smem constant byte address 0x4 - core index']
  #allocation1 [shape = 'u32[144,128]{1,0:T(1,128)}', space=vmem, size = 0x12000, scoped, tag = 'internal scratch']
  %s0 = inlined_call_operand.vmem [shape: bf16[2,4,128], index: 0, kind: input, shape index: {}]
  %s1 = inlined_call_operand.vmem [shape: bf16[2,8,1,128], index: 1, kind: input, shape index: {}]
  %s2 = inlined_call_operand.vmem [shape: bf16[2,8,11,128], index: 2, kind: input, shape index: {}]
  %s3 = inlined_call_operand.hbm [shape: bf16[2,8,16,128], index: 3, kind: output, shape index: {}]
  %s4 = sld [smem:[#allocation0]]
  $region45: #{tpu_custom_call.1} parent=0
    _
  %s6 = ssub.s32 1, %s4
  %s7 = scalar_select 0, %s6, %s4
  $region1: #{tpu_custom_call.1} parent=0
    #allocation2 [shape = 'u8[32768]{0}', space=vmem, size = 0x8000, scoped, tag = 'output window, operand 0']
    #allocation3 [shape = 's32[2]{0}', space=sflag, size = 0x8, scoped, tag = 'scoped memory for tpu_custom_call.1']
    %8 = vsyncpa [#allocation3], 0
    %s9 = scalar_lea.sflag [#allocation3], 1
    %10 = vsyncpa %s9, 0
    loop: start=0, step=1, limit=6
    $region2: #{tpu_custom_call.1} parent=1 // loop_pre_header
      _
    $region3: #{tpu_custom_call.1} parent=1 // loop_header
      %s12 = sphi 0, %s16
      %p13 = scmp.ge.s32.totalorder %s12, 6
      %s19 = sphi 0, %s31
      %s20 = sphi 0, %s27
      %s21 = sphi 0, %s19
      %s22 = sphi 0, %s20
      %s23 = sphi 0, %s21
      %s24 = sphi 0, %s22
      %s34 = sphi 0, %s36
      %s37 = sphi 0, %s34
      %s38 = sphi 0, %s37
      %s54 = sphi 0, %s38
      %s62 = sphi 0, %s64
      %s65 = sphi 0, %s62
      %s66 = sphi 0, %s65
      %s82 = sphi 0, %s66
      %s90 = sphi 0, %s92
      %s93 = sphi 0, %s90
      %s94 = sphi 0, %s93
      %s110 = sphi 0, %s94
      %s118 = sphi 0, %s120
      %s121 = sphi 0, %s118
      %s122 = sphi 0, %s121
      %s138 = sphi 0, %s122
    $region4: #{tpu_custom_call.1} parent=1 // loop_header_branch
      %15 = sbr.rel (%p13) target = $region8
    $region5: #{tpu_custom_call.1} parent=1 // loop_body
      %s17 = ssub.s32 %s12, 1
      %s18 = ssub.s32 %s12, 2
      %s25 = sadd.s32 1, %s20
      %p26 = scmp.ge.s32.totalorder %s25, 2
      %s27 = scalar_select %p26, 0, %s25
      %s28 = sadd.s32 1, %s19
      %s29 = scalar_select %p26, %s28, %s19
      %p30 = scmp.ge.s32.totalorder %s29, 2
      %s31 = scalar_select %p30, 0, %s29
      %s32 = ssub.s32 %s19, %s31
      %p33 = scmp.eq.s32.totalorder %s32, 0
      %s35 = sadd.s32 %s34, 1
      %s36 = scalar_select %p33, %s34, %s35
      %p39 = pneg %p33
      %p40 = scmp.eq.s32.totalorder %s12, 3
      %p41 = por %p39, %p40
      %p42 = scmp.ne.s32.totalorder %s34, %s37
      %p43 = scmp.eq.s32.totalorder %s12, 0
      %p44 = por %p42, %p43
      %p45 = scmp.ne.s32.totalorder %s34, %s37
      %p46 = scmp.eq.s32.totalorder %s17, 3
      %p47 = por %p45, %p46
      %p48 = scmp.ne.s32.totalorder %s37, %s38
      %p49 = scmp.eq.s32.totalorder %s17, 0
      %p50 = por %p48, %p49
      %p51 = scmp.ne.s32.totalorder %s37, %s38
      %p52 = scmp.eq.s32.totalorder %s18, 3
      %p53 = por %p51, %p52
      %p55 = scmp.ne.s32.totalorder %s38, %s54
      %p56 = scmp.eq.s32.totalorder %s18, 0
      %p57 = por %p55, %p56
      %s58 = ssub.s32 %s19, %s31
      %s59 = ssub.s32 %s20, %s27
      %s60 = sor.u32 %s58, %s59
      %p61 = scmp.eq.s32.totalorder %s60, 0
      %s63 = sadd.s32 %s62, 1
      %s64 = scalar_select %p61, %s62, %s63
      %p67 = pneg %p61
      %p68 = scmp.eq.s32.totalorder %s12, 3
      %p69 = por %p67, %p68
      %p70 = scmp.ne.s32.totalorder %s62, %s65
      %p71 = scmp.eq.s32.totalorder %s12, 0
      %p72 = por %p70, %p71
      %p73 = scmp.ne.s32.totalorder %s62, %s65
      %p74 = scmp.eq.s32.totalorder %s17, 3
      %p75 = por %p73, %p74
      %p76 = scmp.ne.s32.totalorder %s65, %s66
      %p77 = scmp.eq.s32.totalorder %s17, 0
      %p78 = por %p76, %p77
      %p79 = scmp.ne.s32.totalorder %s65, %s66
      %p80 = scmp.eq.s32.totalorder %s18, 3
      %p81 = por %p79, %p80
      %p83 = scmp.ne.s32.totalorder %s66, %s82
      %p84 = scmp.eq.s32.totalorder %s18, 0
      %p85 = por %p83, %p84
      %s86 = ssub.s32 %s19, %s31
      %s87 = ssub.s32 %s20, %s27
      %s88 = sor.u32 %s86, %s87
      %p89 = scmp.eq.s32.totalorder %s88, 0
      %s91 = sadd.s32 %s90, 1
      %s92 = scalar_select %p89, %s90, %s91
      %p95 = pneg %p89
      %p96 = scmp.eq.s32.totalorder %s12, 3
      %p97 = por %p95, %p96
      %p98 = scmp.ne.s32.totalorder %s90, %s93
      %p99 = scmp.eq.s32.totalorder %s12, 0
      %p100 = por %p98, %p99
      %p101 = scmp.ne.s32.totalorder %s90, %s93
      %p102 = scmp.eq.s32.totalorder %s17, 3
      %p103 = por %p101, %p102
      %p104 = scmp.ne.s32.totalorder %s93, %s94
      %p105 = scmp.eq.s32.totalorder %s17, 0
      %p106 = por %p104, %p105
      %p107 = scmp.ne.s32.totalorder %s93, %s94
      %p108 = scmp.eq.s32.totalorder %s18, 3
      %p109 = por %p107, %p108
      %p111 = scmp.ne.s32.totalorder %s94, %s110
      %p112 = scmp.eq.s32.totalorder %s18, 0
      %p113 = por %p111, %p112
      %s114 = ssub.s32 %s19, %s31
      %s115 = ssub.s32 %s20, %s27
      %s116 = sor.u32 %s114, %s115
      %p117 = scmp.eq.s32.totalorder %s116, 0
      %s119 = sadd.s32 %s118, 1
      %s120 = scalar_select %p117, %s118, %s119
      %p123 = pneg %p117
      %p124 = scmp.eq.s32.totalorder %s12, 3
      %p125 = por %p123, %p124
      %p126 = scmp.ne.s32.totalorder %s118, %s121
      %p127 = scmp.eq.s32.totalorder %s12, 0
      %p128 = por %p126, %p127
      %p129 = scmp.ne.s32.totalorder %s118, %s121
      %p130 = scmp.eq.s32.totalorder %s17, 3
      %p131 = por %p129, %p130
      %p132 = scmp.ne.s32.totalorder %s121, %s122
      %p133 = scmp.eq.s32.totalorder %s17, 0
      %p134 = por %p132, %p133
      %p135 = scmp.ne.s32.totalorder %s121, %s122
      %p136 = scmp.eq.s32.totalorder %s18, 3
      %p137 = por %p135, %p136
      %p139 = scmp.ne.s32.totalorder %s122, %s138
      %p140 = scmp.eq.s32.totalorder %s18, 0
      %p141 = por %p139, %p140
      %p142 = scmp.le.s32.totalorder 1, %s12
      %p143 = scmp.lt.s32.totalorder %s12, 5
      %p144 = pnand %p142, %p143
      %p145 = pneg %p144
      // Predicated region
      $region9: #{tpu_custom_call.1} parent=5 // pred_check
        _
      $region10: #{tpu_custom_call.1} parent=5 // pred_check_branch
        %147 = sbr.rel (%p144) target = $region12
      $region11: #{tpu_custom_call.1} parent=5 // pred_region
        %s148 = ssub.s32 %s12, 1
      $region12: #{tpu_custom_call.1} parent=5 // pred_fallthru
        _
      %p149 = scmp.lt.s32.totalorder %s12, 4
      // Predicated region
      $region13: #{tpu_custom_call.1} parent=5 // pred_check
        %p150 = pneg %p149
      $region14: #{tpu_custom_call.1} parent=5 // pred_check_branch
        %152 = sbr.rel (%p150) target = $region16
      $region15: #{tpu_custom_call.1} parent=5 // pred_region
        // Predicated region
        $region17: #{tpu_custom_call.1} parent=15 // pred_check
          %p153 = pneg %p44
        $region18: #{tpu_custom_call.1} parent=15 // pred_check_branch
          %155 = sbr.rel (%p153) target = $region20
        $region19: #{tpu_custom_call.1} parent=15 // pred_region
          %p156 = scmp.lt.s32.totalorder %s19, 1
          %s157 = scalar_select %p156, %s19, 1
          %s158 = smul.addr %s157, 2
          %s159 = scalar_lea.vmem %s0, %s158
        $region20: #{tpu_custom_call.1} parent=15 // pred_fallthru
          _
        // Predicated region
        $region21: #{tpu_custom_call.1} parent=15 // pred_check
          %p160 = pneg %p72
        $region22: #{tpu_custom_call.1} parent=15 // pred_check_branch
          %162 = sbr.rel (%p160) target = $region24
        $region23: #{tpu_custom_call.1} parent=15 // pred_region
          %s163 = smul.u32 4, %s20
          %p164 = scmp.lt.s32.totalorder %s19, 1
          %s165 = scalar_select %p164, %s19, 1
          %p166 = scmp.lt.s32.totalorder %s163, 7
          %s167 = scalar_select %p166, %s163, 7
          %s168 = smul.addr %s165, 8
          %s169 = sadd.s32 %s167, %s168
          %s170 = scalar_lea.vmem %s1, %s169
          %s171 = smul.u32 4, %s20
        $region24: #{tpu_custom_call.1} parent=15 // pred_fallthru
          _
        // Predicated region
        $region25: #{tpu_custom_call.1} parent=15 // pred_check
          %p172 = pneg %p100
        $region26: #{tpu_custom_call.1} parent=15 // pred_check_branch
          %174 = sbr.rel (%p172) target = $region28
        $region27: #{tpu_custom_call.1} parent=15 // pred_region
          %s175 = smul.u32 4, %s20
          %p176 = scmp.lt.s32.totalorder %s19, 1
          %s177 = scalar_select %p176, %s19, 1
          %p178 = scmp.lt.s32.totalorder %s175, 7
          %s179 = scalar_select %p178, %s175, 7
          %s180 = smul.addr %s179, 2
          %s181 = smul.addr %s177, 16
          %s182 = sadd.s32 %s180, %s181
          %s183 = smul.addr %s182, 4
          %s184 = scalar_lea.vmem %s2, %s183
          %s185 = smul.u32 4, %s20
        $region28: #{tpu_custom_call.1} parent=15 // pred_fallthru
          _
      $region16: #{tpu_custom_call.1} parent=5 // pred_fallthru
        _
      %p186 = scmp.le.s32.totalorder 1, %s12
      %p187 = scmp.lt.s32.totalorder %s12, 5
      %p188 = pnand %p186, %p187
      %p189 = pneg %p188
      // Predicated region
      $region29: #{tpu_custom_call.1} parent=5 // pred_check
        _
      $region30: #{tpu_custom_call.1} parent=5 // pred_check_branch
        %191 = sbr.rel (%p188) target = $region32
      $region31: #{tpu_custom_call.1} parent=5 // pred_region
        %s192 = ssub.s32 %s12, 1
        %p193 = scmp.lt.s32.totalorder %s21, 1
        %s194 = scalar_select %p193, %s21, 1
        %s195 = smul.addr %s194, 2
        %s196 = scalar_lea.vmem %s0, %s195
        %p197 = pneg %p50
        %p198 = pneg %p47
        %s199 = smul.u32 4, %s22
        %p200 = scmp.lt.s32.totalorder %s21, 1
        %s201 = scalar_select %p200, %s21, 1
        %p202 = scmp.lt.s32.totalorder %s199, 7
        %s203 = scalar_select %p202, %s199, 7
        %s204 = smul.addr %s201, 8
        %s205 = sadd.s32 %s203, %s204
        %s206 = scalar_lea.vmem %s1, %s205
        %p207 = pneg %p78
        %p208 = pneg %p75
        %s209 = smul.u32 4, %s22
        %p210 = scmp.lt.s32.totalorder %s21, 1
        %s211 = scalar_select %p210, %s21, 1
        %p212 = scmp.lt.s32.totalorder %s209, 7
        %s213 = scalar_select %p212, %s209, 7
        %s214 = smul.addr %s213, 2
        %s215 = smul.addr %s211, 16
        %s216 = sadd.s32 %s214, %s215
        %s217 = smul.addr %s216, 4
        %s218 = scalar_lea.vmem %s2, %s217
        %p219 = pneg %p106
        %p220 = pneg %p103
        %p221 = pneg %p134
        %p222 = pneg %p131
        %s223 = sand.u32 %s121, 1
        %s224 = scalar_lea.sflag [#allocation3], %s223
        %s225 = sand.u32 %s121, 1
        %s226 = smul.addr %s225, 32
        %s227 = scalar_lea.vmem [#allocation2], %s226
        %p228 = scmp.lt.s32.totalorder %s21, 1
        %s229 = scalar_select %p228, %s21, 1
        %s230 = smul.addr %s229, 2
        %s231 = scalar_lea.vmem %s0, %s230
        %s232 = smul.u32 4, %s22
        %p233 = scmp.lt.s32.totalorder %s21, 1
        %s234 = scalar_select %p233, %s21, 1
        %p235 = scmp.lt.s32.totalorder %s232, 7
        %s236 = scalar_select %p235, %s232, 7
        %s237 = smul.addr %s234, 8
        %s238 = sadd.s32 %s236, %s237
        %s239 = scalar_lea.vmem %s1, %s238
        %s240 = smul.u32 4, %s22
        %s241 = smul.u32 4, %s22
        %p242 = scmp.lt.s32.totalorder %s21, 1
        %s243 = scalar_select %p242, %s21, 1
        %p244 = scmp.lt.s32.totalorder %s241, 7
        %s245 = scalar_select %p244, %s241, 7
        %s246 = smul.addr %s245, 2
        %s247 = smul.addr %s243, 16
        %s248 = sadd.s32 %s246, %s247
        %s249 = smul.addr %s248, 4
        %s250 = scalar_lea.vmem %s2, %s249
        %s251 = smul.u32 4, %s22
        %s252 = smul.u32 4, %s22
        %v253 = vld [vmem:[%s231] sm:$0x3]
        %v254 = vld [vmem:[%s239] sm:$0x1]
        %v255 = vld [vmem:[%s239 + $0x1] sm:$0x1]
        %v256 = vld [vmem:[%s239 + $0x2] sm:$0x1]
        %v257 = vld [vmem:[%s239 + $0x3] sm:$0x1]
        %v258 = vld [vmem:[%s250] sm:$0xf]
        %v259 = vld [vmem:[%s250 + $0x4] sm:$0x3]
        %v260 = vld [vmem:[%s250 + $0x8] sm:$0xf]
        %v261 = vld [vmem:[%s250 + $0xc] sm:$0x3]
        %v262 = vld [vmem:[%s250 + $0x10] sm:$0xf]
        %v263 = vld [vmem:[%s250 + $0x14] sm:$0x3]
        %v264 = vld [vmem:[%s250 + $0x18] sm:$0xf]
        %v265 = vld [vmem:[%s250 + $0x1c] sm:$0x3]
        %v268 = vunpack.c.l.s4 1983009808
        %v269 = vunpack.c.0.s8 %v268
        %v270 = vlaneseq
        %v271 = vshrl.u32 %v270, 7
        %v272 = vsub.s32 %v269, %v271
        %v273 = vrot.slane %v253, %v272
        %v275 = vshrl.u32 %v273, 16
        %v277 = vrot.slane %v275, 7
        %v278 = vshll.u32 %v273, 16
        %v280 = vor.u32 %v277, %v278
        %v290 = vunpack.c.l.b16 %v258
        %v291 = vunpack.c.l.b16 %v259
        %v292 = vunpack.c.l.b16 %v260
        %v293 = vunpack.c.l.b16 %v261
        %v294 = vunpack.c.l.b16 %v262
        %v295 = vunpack.c.l.b16 %v263
        %v296 = vunpack.c.l.b16 %v264
        %v297 = vunpack.c.l.b16 %v265
        %v298 = vpack.c.b16 %v291, %v290
        %v299 = vpack.c.b16 %v293, %v292
        %v300 = vpack.c.b16 %v295, %v294
        %v301 = vpack.c.b16 %v297, %v296
        %v303 = vshrl.u32 %v298, 16
        %v305 = vrot.slane %v303, 5
        %v306 = vshll.u32 %v298, 16
        %v308 = vrot.slane %v306, 6
        %v309 = vor.u32 %v305, %v308
        %v311 = vshrl.u32 %v299, 16
        %v313 = vrot.slane %v311, 5
        %v314 = vshll.u32 %v299, 16
        %v316 = vrot.slane %v314, 6
        %v317 = vor.u32 %v313, %v316
        %v319 = vshrl.u32 %v300, 16
        %v321 = vrot.slane %v319, 5
        %v322 = vshll.u32 %v300, 16
        %v324 = vrot.slane %v322, 6
        %v325 = vor.u32 %v321, %v324
        %v327 = vshrl.u32 %v301, 16
        %v329 = vrot.slane %v327, 5
        %v330 = vshll.u32 %v301, 16
        %v332 = vrot.slane %v330, 6
        %v333 = vor.u32 %v329, %v332
        %vm338 = vcmask 1040384
        %vm339 = vsmask.f32 256
        %vm340 = vmand %vm338, %vm339
        %v341 = vsel %vm340, %v254, %v280
        %v342 = vsel %vm340, %v255, %v280
        %v343 = vsel %vm340, %v256, %v280
        %v344 = vsel %vm340, %v257, %v280
        %vm345 = vcmask 1042432
        %vm346 = vsmask.f32 2304
        %vm347 = vmand %vm345, %vm346
        %v348 = vsel %vm347, %v341, %v309
        %v349 = vsel %vm347, %v342, %v317
        %v350 = vsel %vm347, %v343, %v325
        %v351 = vsel %vm347, %v344, %v333
        %v356 = vunpack.c.l.b16 %v348
        %v357 = vunpack.c.h.b16 %v348
        %v358 = vunpack.c.l.b16 %v349
        %v359 = vunpack.c.h.b16 %v349
        %v360 = vunpack.c.l.b16 %v350
        %v361 = vunpack.c.h.b16 %v350
        %v362 = vunpack.c.l.b16 %v351
        %v363 = vunpack.c.h.b16 %v351
        %v364 = vpack.c.b16 %v356, %v356
        %v365 = vpack.c.b16 %v357, %v357
        %v366 = vpack.c.b16 %v358, %v358
        %v367 = vpack.c.b16 %v359, %v359
        %v368 = vpack.c.b16 %v360, %v360
        %v369 = vpack.c.b16 %v361, %v361
        %v370 = vpack.c.b16 %v362, %v362
        %v371 = vpack.c.b16 %v363, %v363
        %380 = vst [vmem:[%s227] sm:$0xf] %v364
        %381 = vst [vmem:[%s227 + $0x4] sm:$0xf] %v365
        %382 = vst [vmem:[%s227 + $0x8] sm:$0xf] %v366
        %383 = vst [vmem:[%s227 + $0xc] sm:$0xf] %v367
        %384 = vst [vmem:[%s227 + $0x10] sm:$0xf] %v368
        %385 = vst [vmem:[%s227 + $0x14] sm:$0xf] %v369
        %386 = vst [vmem:[%s227 + $0x18] sm:$0xf] %v370
        %387 = vst [vmem:[%s227 + $0x1c] sm:$0xf] %v371
        %s388 = sand.u32 %s121, 1
        %s389 = scalar_lea.sflag [#allocation3], %s388
        %s390 = sand.u32 %s121, 1
        %s391 = smul.addr %s390, 32
        %s392 = scalar_lea.vmem [#allocation2], %s391
        // Predicated region
        $region33: #{tpu_custom_call.1} parent=31 // pred_check
          %p393 = pneg %p131
        $region34: #{tpu_custom_call.1} parent=31 // pred_check_branch
          %395 = sbr.rel (%p393) target = $region36
        $region35: #{tpu_custom_call.1} parent=31 // pred_region
          %s396 = smul.u32 4, %s22
          %s398 = ssub.s32 512, 512
          %399 = vsyncadd %s389, %s398
          %s400 = smul.addr %s396, 2
          %s401 = smul.addr %s21, 16
          %s402 = sadd.s32 %s400, %s401
          %s403 = smul.addr %s402, 64
          %s404 = scalar_lea.hbm %s3, %s403
          %s405 = sshll.u32 %s392, 4
          %s406 = int_to_ptr.vmem [resolvable:$true] %s405
          %411 = dma.vmem_to_hbm [thread:$0]  %s406, 512, %s404, %s389, 64, 64, 4
        $region36: #{tpu_custom_call.1} parent=31 // pred_fallthru
          _
      $region32: #{tpu_custom_call.1} parent=5 // pred_fallthru
        _
      %p412 = scmp.le.s32.totalorder 2, %s12
      // Predicated region
      $region37: #{tpu_custom_call.1} parent=5 // pred_check
        %p413 = pneg %p412
      $region38: #{tpu_custom_call.1} parent=5 // pred_check_branch
        %415 = sbr.rel (%p413) target = $region40
      $region39: #{tpu_custom_call.1} parent=5 // pred_region
        %s416 = ssub.s32 %s12, 2
        // Predicated region
        $region41: #{tpu_custom_call.1} parent=39 // pred_check
          %p417 = pneg %p137
        $region42: #{tpu_custom_call.1} parent=39 // pred_check_branch
          %419 = sbr.rel (%p417) target = $region44
        $region43: #{tpu_custom_call.1} parent=39 // pred_region
          %s420 = sand.u32 %s122, 1
          %s421 = scalar_lea.sflag [#allocation3], %s420
          %s422 = sand.u32 %s122, 1
          %s423 = smul.addr %s422, 32
          %s424 = scalar_lea.vmem [#allocation2], %s423
          %425 = dma.done %s421, 512
        $region44: #{tpu_custom_call.1} parent=39 // pred_fallthru
          _
      $region40: #{tpu_custom_call.1} parent=5 // pred_fallthru
        _
    $region6: #{tpu_custom_call.1} parent=1 // loop_footer
      %s16 = sadd.s32 1, %s12
    $region7: #{tpu_custom_call.1} parent=1 // loop_footer_branch
      %11 = sbr.rel target = $region3
    $region8: #{tpu_custom_call.1} parent=1 // loop_exit
      _
    %426 = vsyncpa [#allocation3], 1
    %s427 = scalar_lea.sflag [#allocation3], 1
    %428 = vsyncpa %s427, 1

</llo_original>
